<compile_context>
chip_gen: v6e
topology: v6e:2x2x1
jax: 0.10.0
libtpu: 0.0.40
codegen_flags: <defaults>
</compile_context>

<pallas_src>
import functools

import jax
import jax.numpy as jnp
from jax.experimental import pallas as pl
from jax.experimental.pallas import tpu as pltpu


def add_margin_kernel(label_ref, inv_w_ref, x_ref, wt_ref, out_ref, xsq_ref, *, s, m):
    # Grid queries hoisted to the top level of the body (NOT inside pl.when closures):
    # program_id inside a nested cond body cannot be lowered on the interpret/CPU path.
    j = pl.program_id(1)
    k = pl.program_id(2)
    k_last = pl.num_programs(2) - 1

    @pl.when(k == 0)
    def _init():
        out_ref[...] = jnp.zeros_like(out_ref)     # f32 output tile doubles as accumulator
        xsq_ref[...] = jnp.zeros_like(xsq_ref)     # running sum(x*x) for this batch tile

    x = x_ref[...]                                  # (tb, tk) operand dtype (bf16 default)
    w = wt_ref[...]                                 # (tk, tn) operand dtype

    # ||x_i||^2 accumulated in f32 inside the k loop (no separate HBM pre-pass over x).
    xf = x.astype(jnp.float32)
    xsq_ref[...] += jnp.sum(xf * xf, axis=1, keepdims=True)

    # MXU: (tb, tk) @ (tk, tn), f32 accumulation directly into the VMEM-resident output.
    out_ref[...] += jnp.dot(x, w, preferred_element_type=jnp.float32)

    @pl.when(k == k_last)
    def _finalize():
        tb, tn = out_ref.shape
        # s folded into the (tb,1) factor -> single rank-1 scale, one (tb,tn) multiply.
        inv_x = s * jax.lax.rsqrt(jnp.maximum(xsq_ref[...], 1e-24))    # (tb, 1)
        scaled = (inv_x * inv_w_ref[...]) * out_ref[...]               # (tb, tn)
        # Margin at the label column only, no one_hot materialization.
        col = j * tn + jax.lax.broadcasted_iota(jnp.int32, (tb, tn), 1)
        out_ref[...] = jnp.where(col == label_ref[...], scaled - s * m,
                                 scaled).astype(out_ref.dtype)


def _round_up(v, mult):
    return ((v + mult - 1) // mult) * mult


def make_add_margin_product(weight, *, s=30.0, m=0.4, operand_dtype=jnp.bfloat16,
                            tb_max=256, tn_max=1024, tk_max=1024, batch_hint=256):
    """One-time head setup (outside the per-call hot path):
       - W is cast to the MXU operand dtype, transposed to (D, N) and padded once,
       - 1/||w_j|| is precomputed once (f32),
       then returns a jitted fn(x, label) -> (B, N) f32 logits."""
    N, D = weight.shape

    tn = min(_round_up(N, 128), tn_max)
    tk = min(_round_up(D, 128), tk_max)
    # v7x has two TensorCores: make sure the "parallel" (i, j) grid axes have >= 2 tiles
    # when the problem is large enough to split.
    while pl.cdiv(batch_hint, tb_max) * pl.cdiv(N, tn) < 2 and tn > 128:
        tn = max(128, _round_up(tn // 2, 128))
    Np = _round_up(N, tn)
    Dp = _round_up(D, tk)

    # Quantize once; norms are computed (in f32) from the quantized values so the kernel
    # exactly matches normalize(quantized W).
    wq = weight.astype(operand_dtype)
    wqf = wq.astype(jnp.float32)
    inv_w = jax.lax.rsqrt(jnp.maximum(jnp.sum(wqf * wqf, axis=1), 1e-24))        # (N,)

    wtp = jnp.zeros((Dp, Np), operand_dtype).at[:D, :N].set(wq.T)                # (Dp, Np)
    inv_wp = jnp.zeros((1, Np), jnp.float32).at[0, :N].set(inv_w)                # (1, Np)

    kernel = functools.partial(add_margin_kernel, s=float(s), m=float(m))
    op_bytes = jnp.dtype(operand_dtype).itemsize

    def apply(x, label):
        B, D_in = x.shape
        assert D_in == D
        tb = min(_round_up(B, 8), tb_max)
        Bp = _round_up(B, tb)

        xq = x.astype(operand_dtype)
        xp = xq if (Bp, Dp) == (B, D) else (
            jnp.zeros((Bp, Dp), operand_dtype).at[:B, :D].set(xq))
        labelp = jnp.full((Bp, 1), -1, jnp.int32).at[:B, 0].set(label.astype(jnp.int32))

        grid = (Bp // tb, Np // tn, Dp // tk)

        out_p = pl.pallas_call(
            kernel,
            out_shape=jax.ShapeDtypeStruct((Bp, Np), jnp.float32),
            grid_spec=pltpu.PrefetchScalarGridSpec(
                num_scalar_prefetch=0,
                grid=grid,
                in_specs=[
                    pl.BlockSpec((tb, 1), lambda i, j, k: (i, 0)),     # labels (int32)
                    pl.BlockSpec((1, tn), lambda i, j, k: (0, j)),     # 1/||w_j|| row (f32)
                    pl.BlockSpec((tb, tk), lambda i, j, k: (i, k)),    # x tile
                    pl.BlockSpec((tk, tn), lambda i, j, k: (k, j)),    # W^T tile (MXU RHS)
                ],
                out_specs=pl.BlockSpec((tb, tn), lambda i, j, k: (i, j)),
                scratch_shapes=[pltpu.VMEM((tb, 1), jnp.float32)],     # sum(x*x) accumulator
            ),
            compiler_params=pltpu.CompilerParams(
                dimension_semantics=("parallel", "parallel", "arbitrary"),
                # Double-buffered bf16 tiles at (256, 1024, 1024) are ~8 MiB; 48 MiB keeps
                # headroom on v5e/v6e (128 MiB VMEM) and stays under v7x's 64 MiB physical.
                vmem_limit_bytes=48 * 1024 * 1024,
            ),
            cost_estimate=pl.CostEstimate(
                flops=2 * Bp * Np * Dp,
                transcendentals=0,
                bytes_accessed=(Bp * Dp + Dp * Np) * op_bytes + Bp * Np * 4,
            ),
        )(labelp, inv_wp, xp, wtp)

        return out_p[:B, :N]

    return jax.jit(apply)


def _reference(x, weight, label, *, s=30.0, m=0.4):
    xn = x / jnp.maximum(jnp.linalg.norm(x, axis=1, keepdims=True), 1e-12)
    wn = weight / jnp.maximum(jnp.linalg.norm(weight, axis=1, keepdims=True), 1e-12)
    cosine = jnp.einsum("bd,nd->bn", xn, wn, precision=jax.lax.Precision.HIGHEST)
    one_hot = jax.nn.one_hot(label, weight.shape[0], dtype=jnp.float32)
    return s * (one_hot * (cosine - m) + (1.0 - one_hot) * cosine)


if __name__ == "__main__":
    key = jax.random.PRNGKey(0)
    k_x, k_w, k_l = jax.random.split(key, 3)

    batch, in_features, out_features = 8, 32, 16
    s_val, m_val = 30.0, 0.4

    # Deterministic Xavier-uniform weight init (as in the PyTorch module).
    bound = (6.0 / (in_features + out_features)) ** 0.5
    weight = jax.random.uniform(
        k_w, (out_features, in_features), jnp.float32, minval=-bound, maxval=bound)
    x = jax.random.normal(k_x, (batch, in_features), jnp.float32)
    label = jax.random.randint(k_l, (batch,), 0, out_features, jnp.int32)

    # f32 MXU operands: must match the reference to 1e-4.
    head_f32 = make_add_margin_product(weight, s=s_val, m=m_val, operand_dtype=jnp.float32)
    out_f32 = jax.block_until_ready(head_f32(x, label))
    ref_f32 = _reference(x, weight, label, s=s_val, m=m_val)
    assert out_f32.shape == (batch, out_features)
    assert jnp.allclose(out_f32, ref_f32, atol=1e-4, rtol=1e-4), "f32 mismatch vs reference"

    # Default bf16 MXU operands (native MXU rate, half the HBM/VMEM traffic): compare against
    # the reference evaluated on the same bf16-quantized operands (f32 accumulation otherwise).
    head_bf16 = make_add_margin_product(weight, s=s_val, m=m_val)
    out_bf16 = jax.block_until_ready(head_bf16(x, label))
    xq = x.astype(jnp.bfloat16).astype(jnp.float32)
    wq = weight.astype(jnp.bfloat16).astype(jnp.float32)
    ref_bf16 = _reference(xq, wq, label, s=s_val, m=m_val)
    assert out_bf16.shape == (batch, out_features)
    assert jnp.allclose(out_bf16, ref_bf16, atol=5e-3, rtol=5e-3), "bf16 mismatch vs reference"

    print("KERNEL_OK")
</pallas_src>

<mosaic_0001>
module attributes {stable_mosaic.version = 11 : i64} {
  func.func @add_margin_kernel(%arg0: i32, %arg1: i32, %arg2: i32, %arg3: memref<8x1xi32, #tpu.memory_space<vmem>>, %arg4: memref<1x128xf32, #tpu.memory_space<vmem>>, %arg5: memref<8x128xf32, #tpu.memory_space<vmem>>, %arg6: memref<128x128xf32, #tpu.memory_space<vmem>>, %arg7: memref<8x128xf32, #tpu.memory_space<vmem>>, %arg8: memref<8x1xf32, #tpu.memory_space<vmem>>) attributes {dimension_semantics = [#tpu.dimension_semantics<parallel>, #tpu.dimension_semantics<parallel>, #tpu.dimension_semantics<arbitrary>], iteration_bounds = array<i64: 1, 1, 1>, scalar_prefetch = 0 : i64, scratch_operands = 1 : i64, tpu.core_type = #tpu.core_type<tc>, window_params = [{transform_indices = @transform_0, window_bounds = array<i64: 8, 1>}, {transform_indices = @transform_1, window_bounds = array<i64: 1, 128>}, {transform_indices = @transform_2, window_bounds = array<i64: 8, 128>}, {transform_indices = @transform_3, window_bounds = array<i64: 128, 128>}, {transform_indices = @transform_4, window_bounds = array<i64: 8, 128>}]} {
    %c0_i32 = arith.constant 0 : i32
    %0 = arith.cmpi eq, %arg2, %c0_i32 : i32
    %1 = arith.extui %0 : i1 to i32
    %c0_i32_0 = arith.constant 0 : i32
    %2 = arith.cmpi ne, %1, %c0_i32_0 : i32
    scf.if %2 {
      %cst_15 = arith.constant 0.000000e+00 : f32
      %18 = vector.broadcast %cst_15 : f32 to vector<8x128xf32>
      %c0_16 = arith.constant 0 : index
      %c0_17 = arith.constant 0 : index
      %19 = vector.load %arg7[%c0_16, %c0_17] : memref<8x128xf32, #tpu.memory_space<vmem>>, vector<8x128xf32>
      tpu.vector_store %arg7[%c0_16, %c0_17], %18 {strides = array<i32>} : memref<8x128xf32, #tpu.memory_space<vmem>>, vector<8x128xf32>,
      %cst_18 = arith.constant 0.000000e+00 : f32
      %20 = vector.broadcast %cst_18 : f32 to vector<8x1xf32>
      %c0_19 = arith.constant 0 : index
      %c0_20 = arith.constant 0 : index
      %21 = vector.load %arg8[%c0_19, %c0_20] : memref<8x1xf32, #tpu.memory_space<vmem>>, vector<8x1xf32>
      tpu.vector_store %arg8[%c0_19, %c0_20], %20 {strides = array<i32>} : memref<8x1xf32, #tpu.memory_space<vmem>>, vector<8x1xf32>,
    } else {
    }
    %c0 = arith.constant 0 : index
    %c0_1 = arith.constant 0 : index
    %3 = vector.load %arg5[%c0, %c0_1] : memref<8x128xf32, #tpu.memory_space<vmem>>, vector<8x128xf32>
    %c0_2 = arith.constant 0 : index
    %c0_3 = arith.constant 0 : index
    %4 = vector.load %arg6[%c0_2, %c0_3] : memref<128x128xf32, #tpu.memory_space<vmem>>, vector<128x128xf32>
    %c0_4 = arith.constant 0 : index
    %c0_5 = arith.constant 0 : index
    %5 = vector.load %arg8[%c0_4, %c0_5] : memref<8x1xf32, #tpu.memory_space<vmem>>, vector<8x1xf32>
    %6 = arith.mulf %3, %3 : vector<8x128xf32>
    %cst = arith.constant dense<0.000000e+00> : vector<8xf32>
    %7 = vector.multi_reduction <add>, %6, %cst [1] : vector<8x128xf32> to vector<8xf32>
    %8 = vector.shape_cast %7 : vector<8xf32> to vector<8x1xf32>
    %9 = arith.addf %5, %8 : vector<8x1xf32>
    %c0_6 = arith.constant 0 : index
    %c0_7 = arith.constant 0 : index
    %10 = vector.load %arg8[%c0_6, %c0_7] : memref<8x1xf32, #tpu.memory_space<vmem>>, vector<8x1xf32>
    tpu.vector_store %arg8[%c0_6, %c0_7], %9 {strides = array<i32>} : memref<8x1xf32, #tpu.memory_space<vmem>>, vector<8x1xf32>,
    %c0_8 = arith.constant 0 : index
    %c0_9 = arith.constant 0 : index
    %11 = vector.load %arg7[%c0_8, %c0_9] : memref<8x128xf32, #tpu.memory_space<vmem>>, vector<8x128xf32>
    %cst_10 = arith.constant dense<0.000000e+00> : vector<8x128xf32>
    %12 = tpu.matmul %3, %4, %cst_10 {dimension_numbers = #tpu.dot_dimension_numbers<[1], [0], [0], [1], [0, 0, 1, 1], [], []>} : vector<8x128xf32>, vector<128x128xf32>, vector<8x128xf32> -> vector<8x128xf32>
    %13 = arith.addf %11, %12 : vector<8x128xf32>
    %c0_11 = arith.constant 0 : index
    %c0_12 = arith.constant 0 : index
    %14 = vector.load %arg7[%c0_11, %c0_12] : memref<8x128xf32, #tpu.memory_space<vmem>>, vector<8x128xf32>
    tpu.vector_store %arg7[%c0_11, %c0_12], %13 {strides = array<i32>} : memref<8x128xf32, #tpu.memory_space<vmem>>, vector<8x128xf32>,
    %c0_i32_13 = arith.constant 0 : i32
    %15 = arith.cmpi eq, %arg2, %c0_i32_13 : i32
    %16 = arith.extui %15 : i1 to i32
    %c0_i32_14 = arith.constant 0 : i32
    %17 = arith.cmpi ne, %16, %c0_i32_14 : i32
    scf.if %17 {
      %c0_15 = arith.constant 0 : index
      %c0_16 = arith.constant 0 : index
      %18 = vector.load %arg8[%c0_15, %c0_16] : memref<8x1xf32, #tpu.memory_space<vmem>>, vector<8x1xf32>
      %cst_17 = arith.constant 1.000000e-24 : f32
      %19 = vector.broadcast %cst_17 : f32 to vector<8x1xf32>
      %20 = arith.maximumf %18, %19 : vector<8x1xf32>
      %21 = math.rsqrt %20 : vector<8x1xf32>
      %cst_18 = arith.constant 3.000000e+01 : f32
      %22 = vector.broadcast %cst_18 : f32 to vector<8x1xf32>
      %23 = arith.mulf %22, %21 : vector<8x1xf32>
      %c0_19 = arith.constant 0 : index
      %c0_20 = arith.constant 0 : index
      %24 = vector.load %arg4[%c0_19, %c0_20] : memref<1x128xf32, #tpu.memory_space<vmem>>, vector<1x128xf32>
      %25 = vector.broadcast %23 : vector<8x1xf32> to vector<8x128xf32>
      %26 = vector.broadcast %24 : vector<1x128xf32> to vector<8x128xf32>
      %27 = arith.mulf %25, %26 : vector<8x128xf32>
      %c0_21 = arith.constant 0 : index
      %c0_22 = arith.constant 0 : index
      %28 = vector.load %arg7[%c0_21, %c0_22] : memref<8x128xf32, #tpu.memory_space<vmem>>, vector<8x128xf32>
      %29 = arith.mulf %27, %28 : vector<8x128xf32>
      %c128_i32 = arith.constant 128 : i32
      %30 = arith.muli %arg1, %c128_i32 : i32
      %31 = tpu.iota {dimensions = array<i32: 1>} : vector<8x128xi32>
      %32 = vector.broadcast %30 : i32 to vector<8x128xi32>
      %33 = arith.addi %32, %31 : vector<8x128xi32>
      %c0_23 = arith.constant 0 : index
      %c0_24 = arith.constant 0 : index
      %34 = vector.load %arg3[%c0_23, %c0_24] : memref<8x1xi32, #tpu.memory_space<vmem>>, vector<8x1xi32>
      %35 = vector.broadcast %34 : vector<8x1xi32> to vector<8x128xi32>
      %36 = arith.cmpi eq, %33, %35 : vector<8x128xi32>
      %cst_25 = arith.constant 1.200000e+01 : f32
      %37 = vector.broadcast %cst_25 : f32 to vector<8x128xf32>
      %38 = arith.subf %29, %37 : vector<8x128xf32>
      %39 = arith.select %36, %38, %29 : vector<8x128xi1>, vector<8x128xf32>
      %c0_26 = arith.constant 0 : index
      %c0_27 = arith.constant 0 : index
      %40 = vector.load %arg7[%c0_26, %c0_27] : memref<8x128xf32, #tpu.memory_space<vmem>>, vector<8x128xf32>
      tpu.vector_store %arg7[%c0_26, %c0_27], %39 {strides = array<i32>} : memref<8x128xf32, #tpu.memory_space<vmem>>, vector<8x128xf32>,
    } else {
    }
    return
  }
  func.func @transform_0(%arg0: i32, %arg1: i32, %arg2: i32) -> (i32, i32) {
    %c0_i32 = arith.constant 0 : i32
    %c0_i32_0 = arith.constant 0 : i32
    return %arg0, %c0_i32 : i32, i32
  }
  func.func @transform_1(%arg0: i32, %arg1: i32, %arg2: i32) -> (i32, i32) {
    %c0_i32 = arith.constant 0 : i32
    %c0_i32_0 = arith.constant 0 : i32
    return %c0_i32, %arg1 : i32, i32
  }
  func.func @transform_2(%arg0: i32, %arg1: i32, %arg2: i32) -> (i32, i32) {
    %c0_i32 = arith.constant 0 : i32
    return %arg0, %arg2 : i32, i32
  }
  func.func @transform_3(%arg0: i32, %arg1: i32, %arg2: i32) -> (i32, i32) {
    %c0_i32 = arith.constant 0 : i32
    return %arg2, %arg1 : i32, i32
  }
  func.func @transform_4(%arg0: i32, %arg1: i32, %arg2: i32) -> (i32, i32) {
    %c0_i32 = arith.constant 0 : i32
    return %arg0, %arg1 : i32, i32
  }
}

</mosaic_0001>

<llo_original>
// kernel: apply.1
$region0: #{apply.1}
  #allocation0 [shape = 'u32[]', space=smem, size = 0x4, offset = 0x4, fixed_abs, tag = 'smem constant byte address 0x4 - core index']
  #allocation1 [shape = 'u32[144,128]{1,0:T(1,128)}', space=vmem, size = 0x12000, scoped, tag = 'internal scratch']
  #allocation2 [shape = 'f32[8,1]{1,0:T(8,128)}', space=vmem, size = 0x1000, scoped, tag = 'scratch operand']
  %s0 = inlined_call_operand.vmem [shape: s32[8,1], index: 0, kind: input, shape index: {}]
  %s1 = inlined_call_operand.vmem [shape: f32[1,128], index: 1, kind: input, shape index: {}]
  %s2 = inlined_call_operand.vmem [shape: f32[8,128], index: 2, kind: input, shape index: {}]
  %s3 = inlined_call_operand.hbm [shape: f32[128,128], index: 3, kind: input, shape index: {}]
  %s4 = inlined_call_operand.hbm [shape: f32[8,128], index: 4, kind: output, shape index: {}]
  %s5 = sld [smem:[#allocation0]]
  $region38: #{apply.1} parent=0
    _
  %s7 = ssub.s32 1, %s5
  %s8 = scalar_select 0, %s7, %s5
  $region1: #{apply.1} parent=0
    #allocation3 [shape = 'u8[65536]{0}', space=vmem, size = 0x10000, scoped, tag = 'input window, operand 3, single buffered']
    #allocation4 [shape = 's32[1]{0}', space=sflag, size = 0x4, scoped, tag = 'scoped memory for apply.1']
    #allocation5 [shape = 's32[1]{0}', space=sflag, size = 0x4, scoped, tag = 'scoped memory for apply.1']
    #allocation6 [shape = 'u8[4096]{0}', space=vmem, size = 0x1000, scoped, tag = 'output window, operand 0, single buffered']
    %9 = vsyncpa [#allocation4], 0
    %10 = vsyncpa [#allocation5], 0
    // Predicated region
    $region2: #{apply.1} parent=1 // pred_check
      _
    $region3: #{apply.1} parent=1 // pred_check_branch
      %12 = sbr.rel (0) target = $region5
    $region4: #{apply.1} parent=1 // pred_region
      _
    $region5: #{apply.1} parent=1 // pred_fallthru
      _
    // Predicated region
    $region6: #{apply.1} parent=1 // pred_check
      _
    $region7: #{apply.1} parent=1 // pred_check_branch
      %14 = sbr.rel (0) target = $region9
    $region8: #{apply.1} parent=1 // pred_region
      _
    $region9: #{apply.1} parent=1 // pred_fallthru
      _
    // Predicated region
    $region10: #{apply.1} parent=1 // pred_check
      _
    $region11: #{apply.1} parent=1 // pred_check_branch
      %16 = sbr.rel (0) target = $region13
    $region12: #{apply.1} parent=1 // pred_region
      _
    $region13: #{apply.1} parent=1 // pred_fallthru
      _
    // Predicated region
    $region14: #{apply.1} parent=1 // pred_check
      _
    $region15: #{apply.1} parent=1 // pred_check_branch
      %18 = sbr.rel (0) target = $region17
    $region16: #{apply.1} parent=1 // pred_region
      %s20 = ssub.s32 2048, 2048
      %21 = vsyncadd [#allocation4], %s20
      %s22 = sshll.u32 [#allocation3], 4
      %s23 = int_to_ptr.vmem [resolvable:$true] %s22
      %28 = dma.hbm_to_vmem [thread:$0]  %s3, 2048, %s23, [#allocation4], 128, 128, 8
    $region17: #{apply.1} parent=1 // pred_fallthru
      _
    // Predicated region
    $region18: #{apply.1} parent=1 // pred_check
      _
    $region19: #{apply.1} parent=1 // pred_check_branch
      %30 = sbr.rel (0) target = $region21
    $region20: #{apply.1} parent=1 // pred_region
      %31 = dma.done [#allocation4], 2048
    $region21: #{apply.1} parent=1 // pred_fallthru
      _
    %p32 = scmp.eq.s32.totalorder 0, 0
    // Predicated region
    $region22: #{apply.1} parent=1 // pred_check
      %p33 = pneg %p32
    $region23: #{apply.1} parent=1 // pred_check_branch
      %35 = sbr.rel (%p33) target = $region25
    $region24: #{apply.1} parent=1 // pred_region
      %36 = vst [vmem:[#allocation6] sm:$0xff] 0.0
      %vm37 = vcmask 7168
      %38 = vst.msk [vmem:[#allocation2] sm:$0xff] %vm37, 0.0
    $region25: #{apply.1} parent=1 // pred_fallthru
      _
    %v39 = vld [vmem:[%s2] sm:$0xff]
    %v40 = vld [vmem:[#allocation3] sm:$0xff]
    %v41 = vld [vmem:[#allocation3 + $0x8] sm:$0xff]
    %v42 = vld [vmem:[#allocation3 + $0x10] sm:$0xff]
    %v43 = vld [vmem:[#allocation3 + $0x18] sm:$0xff]
    %v44 = vld [vmem:[#allocation3 + $0x20] sm:$0xff]
    %v45 = vld [vmem:[#allocation3 + $0x28] sm:$0xff]
    %v46 = vld [vmem:[#allocation3 + $0x30] sm:$0xff]
    %v47 = vld [vmem:[#allocation3 + $0x38] sm:$0xff]
    %v48 = vld [vmem:[#allocation3 + $0x40] sm:$0xff]
    %v49 = vld [vmem:[#allocation3 + $0x48] sm:$0xff]
    %v50 = vld [vmem:[#allocation3 + $0x50] sm:$0xff]
    %v51 = vld [vmem:[#allocation3 + $0x58] sm:$0xff]
    %v52 = vld [vmem:[#allocation3 + $0x60] sm:$0xff]
    %v53 = vld [vmem:[#allocation3 + $0x68] sm:$0xff]
    %v54 = vld [vmem:[#allocation3 + $0x70] sm:$0xff]
    %v55 = vld [vmem:[#allocation3 + $0x78] sm:$0xff]
    %v56 = vld [vmem:[#allocation2] sm:$0xff]
    %v57 = vmul.f32 %v39, %v39
    %58 = vadd.xlane.f32.xlu0 %v57
    %v59 = vpop.xlane.xlu0 %58
    %v60 = vadd.f32 %v56, %v59
    %vm61 = vcmask 7168
    %62 = vst.msk [vmem:[#allocation2] sm:$0xff] %vm61, %v60
    %v63 = vld [vmem:[#allocation6] sm:$0xff]
    %64 = vmatprep.subr.mxu0 0.0
    %65 = vmatpush1.msra.mxu0 %v55
    %66 = vmatprep.subr.mxu0 0.0
    %67 = vmatpush1.msra.mxu0 %v54
    %68 = vmatprep.subr.mxu0 0.0
    %69 = vmatpush1.msra.mxu0 %v53
    %70 = vmatprep.subr.mxu0 0.0
    %71 = vmatpush1.msra.mxu0 %v52
    %72 = vmatprep.subr.mxu0 0.0
    %73 = vmatpush1.msra.mxu0 %v51
    %74 = vmatprep.subr.mxu0 0.0
    %75 = vmatpush1.msra.mxu0 %v50
    %76 = vmatprep.subr.mxu0 0.0
    %77 = vmatpush1.msra.mxu0 %v49
    %78 = vmatprep.subr.mxu0 0.0
    %79 = vmatpush1.msra.mxu0 %v48
    %80 = vmatprep.subr.mxu0 0.0
    %81 = vmatpush1.msra.mxu0 %v47
    %82 = vmatprep.subr.mxu0 0.0
    %83 = vmatpush1.msra.mxu0 %v46
    %84 = vmatprep.subr.mxu0 0.0
    %85 = vmatpush1.msra.mxu0 %v45
    %86 = vmatprep.subr.mxu0 0.0
    %87 = vmatpush1.msra.mxu0 %v44
    %88 = vmatprep.subr.mxu0 0.0
    %89 = vmatpush1.msra.mxu0 %v43
    %90 = vmatprep.subr.mxu0 0.0
    %91 = vmatpush1.msra.mxu0 %v42
    %92 = vmatprep.subr.mxu0 0.0
    %93 = vmatpush1.msra.mxu0 %v41
    %94 = vmatprep.subr.mxu0 0.0
    %95 = vmatpush1.msra.mxu0 %v40
    %96 = vmatprep.subr.mxu0 0.0
    %97 = vmatpush2.msra.mxu0 0.0
    %98 = vmatprep.subr.mxu0 0.0
    %99 = vmatpush2.msra.mxu0 0.0
    %100 = vmatprep.subr.mxu0 0.0
    %101 = vmatpush2.msra.mxu0 0.0
    %102 = vmatprep.subr.mxu0 0.0
    %103 = vmatpush2.msra.mxu0 0.0
    %104 = vmatprep.subr.mxu0 0.0
    %105 = vmatpush2.msra.mxu0 0.0
    %106 = vmatprep.subr.mxu0 0.0
    %107 = vmatpush2.msra.mxu0 0.0
    %108 = vmatprep.subr.mxu0 0.0
    %109 = vmatpush2.msra.mxu0 0.0
    %110 = vmatprep.subr.mxu0 0.0
    %111 = vmatpush2.msra.mxu0 0.0
    %112 = vmatprep.subr.mxu0 0.0
    %113 = vmatpush2.msra.mxu0 0.0
    %114 = vmatprep.subr.mxu0 0.0
    %115 = vmatpush2.msra.mxu0 0.0
    %116 = vmatprep.subr.mxu0 0.0
    %117 = vmatpush2.msra.mxu0 0.0
    %118 = vmatprep.subr.mxu0 0.0
    %119 = vmatpush2.msra.mxu0 0.0
    %120 = vmatprep.subr.mxu0 0.0
    %121 = vmatpush2.msra.mxu0 0.0
    %122 = vmatprep.subr.mxu0 0.0
    %123 = vmatpush2.msra.mxu0 0.0
    %124 = vmatprep.subr.mxu0 0.0
    %125 = vmatpush2.msra.mxu0 0.0
    %126 = vmatprep.subr.mxu0 0.0
    %127 = vmatpush2.msra.mxu0 0.0
    %128 = vmatprep.mubr.f32.mxu0 0.0
    %129 = vmatmul.mubr.f32.gmra.mxu0 %v39
    %v130 = vpop.f32.mrf.mxu0
    %v131 = vadd.f32 0.0, %v130
    %v132 = vpop.f32.mrf.mxu0
    %133 = vdwg.mxu0
    %v134 = vadd.f32 %v63, %v131
    %135 = vst [vmem:[#allocation6] sm:$0xff] %v134
    // Predicated region
    $region26: #{apply.1} parent=1 // pred_check
      %p136 = pneg %p32
    $region27: #{apply.1} parent=1 // pred_check_branch
      %138 = sbr.rel (%p136) target = $region29
    $region28: #{apply.1} parent=1 // pred_region
      %v139 = vld [vmem:[#allocation2] sm:$0xff]
      %v140 = vmax.f32 %v139, 1e-24
      %v141 = vrsqrt.pop %v140
      %v142 = vmul.f32 %v141, 30.0
      %v143 = vld [vmem:[%s1] sm:$0x1]
      %145 = vset.pattern.permute.xlu0 0
      %146 = vperm.xlu0 %145, %v142
      %v147 = vpop.permute.xlu0 %146
      %v150 = vlaneseq
      %v151 = vshrl.u32 %v150, 7
      %v152 = vsub.s32 0, %v151
      %v153 = vrot.slane %v143, %v152
      %v155 = vmul.f32 %v147, %v153
      %v156 = vld [vmem:[#allocation6] sm:$0xff]
      %v157 = vmul.f32 %v155, %v156
      %s158 = smul.u32 0, 128
      %v159 = vlaneseq
      %v160 = vand.u32 %v159, 127
      %v161 = vstv %s158
      %v162 = vadd.s32 %v161, %v160
      %v163 = vld [vmem:[%s0] sm:$0xff]
      %164 = vset.pattern.permute.xlu0 0
      %165 = vperm.xlu0 %164, %v163
      %v166 = vpop.permute.xlu0 %165
      %vm167 = vcmp.eq.s32.totalorder %v162, %v166
      %v168 = vsub.f32 %v157, 12.0
      %v169 = vsel %vm167, %v168, %v157
      %170 = vst [vmem:[#allocation6] sm:$0xff] %v169
    $region29: #{apply.1} parent=1 // pred_fallthru
      _
    // Predicated region
    $region30: #{apply.1} parent=1 // pred_check
      _
    $region31: #{apply.1} parent=1 // pred_check_branch
      %172 = sbr.rel (0) target = $region33
    $region32: #{apply.1} parent=1 // pred_region
      %s174 = ssub.s32 128, 128
      %175 = vsyncadd [#allocation5], %s174
      %s177 = sshll.u32 [#allocation6], 4
      %s178 = int_to_ptr.vmem [resolvable:$true] %s177
      %180 = dma.vmem_to_hbm [thread:$0]  %s178, 128, %s4, [#allocation5]
    $region33: #{apply.1} parent=1 // pred_fallthru
      _
    // Predicated region
    $region34: #{apply.1} parent=1 // pred_check
      _
    $region35: #{apply.1} parent=1 // pred_check_branch
      %182 = sbr.rel (0) target = $region37
    $region36: #{apply.1} parent=1 // pred_region
      %183 = dma.done [#allocation5], 128
    $region37: #{apply.1} parent=1 // pred_fallthru
      _
    %184 = vsyncpa [#allocation4], 1
    %185 = vsyncpa [#allocation5], 1

</llo_original>
